<compile_context>
chip_gen: v6e
topology: v6e:2x2x1
jax: 0.10.0
libtpu: 0.0.40
codegen_flags: <defaults>
</compile_context>

<pallas_src>
import functools

import jax
import jax.numpy as jnp
from jax.experimental import pallas as pl
from jax.experimental.pallas import tpu as pltpu


def _round_up(v, m):
    return ((v + m - 1) // m) * m


def _cdiv(a, b):
    return (a + b - 1) // b


def _vmem_capacity_bytes():
    """Physical per-core VMEM; conservative 64 MiB (v7x) fallback."""
    try:
        return int(pltpu.get_tpu_info().vmem_capacity_bytes)
    except Exception:
        return 64 << 20


# --------------------------------------------------------------------------
# Kernel: the whole (chunk of the) layer stack fused on one batch tile.
# --------------------------------------------------------------------------
def _fused_mlp_kernel(*refs, hidden_flags, apply_relu):
    """refs = (x_ref, w0, b0, w1, b1, ..., o_ref).

    h = x; for each layer: h = h @ W_t + b  (ReLU / eval-dropout on hidden
    layers).  MXU runs in the stored weight dtype (bf16 by default) with f32
    accumulation; bias-add / ReLU epilogue stays in f32 on the VPU.
    """
    x_ref = refs[0]
    o_ref = refs[-1]
    h = x_ref[...].astype(jnp.float32)
    for l, is_hidden in enumerate(hidden_flags):
        w = refs[1 + 2 * l][...]                  # (din, dout_pad), compute dtype
        b = refs[2 + 2 * l][...]                  # (1, dout_pad), f32
        y = jnp.dot(h.astype(w.dtype), w, preferred_element_type=jnp.float32)
        y = y + b
        if is_hidden:
            if apply_relu:
                y = jnp.maximum(y, 0.0)
            # activation None -> dropout; identity in eval mode.
        h = y
    o_ref[...] = h.astype(o_ref.dtype)


def _run_fused_chunk(layers, x_p, hidden_flags, apply_relu, tm, vmem_limit,
                     out_dtype, single_buffer_weights):
    """One fused pallas_call over a chunk of layers.

    x_p: (b_pad, din) with b_pad % tm == 0.  Returns (b_pad, dout_pad)."""
    b_pad, din = x_p.shape
    dout_pad = layers[-1][0].shape[1]
    grid = (b_pad // tm,)

    # Constant index_maps -> weights/biases DMA'd once, VMEM-resident across
    # batch tiles; single-buffer them to halve their VMEM footprint.
    w_kwargs = {}
    if single_buffer_weights:
        w_kwargs = dict(pipeline_mode=pl.Buffered(1))

    in_specs = [pl.BlockSpec((tm, din), lambda i: (i, 0))]
    flat_params = []
    for (w, b) in layers:
        in_specs.append(pl.BlockSpec(w.shape, lambda i: (0, 0), **w_kwargs))
        in_specs.append(pl.BlockSpec(b.shape, lambda i: (0, 0), **w_kwargs))
        flat_params += [w, b]
    out_specs = pl.BlockSpec((tm, dout_pad), lambda i: (i, 0))

    kernel = functools.partial(_fused_mlp_kernel,
                               hidden_flags=tuple(hidden_flags),
                               apply_relu=apply_relu)

    return pl.pallas_call(
        kernel,
        out_shape=jax.ShapeDtypeStruct((b_pad, dout_pad), out_dtype),
        grid=grid,
        in_specs=in_specs,
        out_specs=out_specs,
        compiler_params=pltpu.CompilerParams(
            dimension_semantics=("parallel",),
            vmem_limit_bytes=int(vmem_limit)),
    )(x_p, *flat_params)


# --------------------------------------------------------------------------
# Parameter prep (one-time) and forward.
# --------------------------------------------------------------------------
def prepare_mlp_params(params, compute_dtype=jnp.bfloat16):
    """One-time prep of the raw (w_t, b) list:
      * cast weights to `compute_dtype` (bf16 default -> half the DMA bytes
        and half the resident VMEM, MXU-native on v6e/v7x),
      * zero-pad every OUTPUT feature dim to a multiple of 128 lanes
        (lane-dense MXU tiles + unmasked output stores; zero pad is inert),
      * keep the very first input dim unpadded (block == full dim is legal),
      * biases kept in f32, shaped (1, dout_pad) for broadcast.
    """
    layers = []
    prev_dim = params[0][0].shape[0]            # first input dim stays unpadded
    for (w_t, b) in params:
        din, dout = w_t.shape
        dout_pad = _round_up(dout, 128)
        w_p = jnp.zeros((prev_dim, dout_pad), compute_dtype)
        w_p = w_p.at[:din, :dout].set(w_t.astype(compute_dtype))
        b_p = jnp.zeros((1, dout_pad), jnp.float32)
        b_p = b_p.at[0, :dout].set(b.astype(jnp.float32))
        layers.append((w_p, b_p))
        prev_dim = dout_pad
    return {"layers": layers,
            "in_dim": params[0][0].shape[0],
            "out_dim": params[-1][0].shape[1]}


def mlp_forward(prepped, x, activation=None, max_batch_tile=1024):
    """Fused MLP forward on pre-padded params.  x: (B, input_dim)."""
    layers = prepped["layers"]
    out_dim = prepped["out_dim"]
    apply_relu = (activation == "relu")
    B, Din = x.shape
    assert layers[0][0].shape[0] == Din, "input feature dim mismatch"

    cap = _vmem_capacity_bytes()
    x_bytes = x.dtype.itemsize

    def _layer_bytes(w, b):
        # (1, N) bias pads to 8 sublanes in VMEM.
        return w.size * w.dtype.itemsize + 8 * b.shape[1] * 4

    total_w_bytes = sum(_layer_bytes(w, b) for (w, b) in layers)
    max_feat = max([Din] + [w.shape[1] for (w, _) in layers])
    dout_pad = layers[-1][0].shape[1]

    def _needed(tm, wbytes):
        io = 2 * tm * Din * x_bytes + 2 * tm * dout_pad * x_bytes   # 2 buffers
        tmp = 3 * tm * max_feat * 4                                 # f32 temps
        return int(1.25 * (io + tmp + wbytes)) + (4 << 20)          # +headroom

    # Batch tiling: minimise pad waste, keep >= 2 tiles when there are enough
    # rows (feeds both v7x TensorCores), shrink the tile until it fits VMEM.
    b8 = _round_up(B, 8)
    n_tiles = max(_cdiv(b8, max_batch_tile), 2 if b8 >= 16 else 1)
    tm = _round_up(_cdiv(b8, n_tiles), 8)
    while tm > 8 and _needed(tm, total_w_bytes) > int(0.85 * cap):
        tm = max(8, _round_up(tm // 2, 8))
    b_pad = _round_up(b8, tm)

    x_p = x if b_pad == B else jnp.zeros((b_pad, Din), x.dtype).at[:B].set(x)

    # Split the layer stack into chunks whose resident weights fit the VMEM
    # budget (one chunk in the common case; streaming fallback for huge MLPs).
    chunks, cur, cur_bytes = [], [], 0
    for lw in layers:
        lb = _layer_bytes(*lw)
        if cur and _needed(tm, cur_bytes + lb) > int(0.85 * cap):
            chunks.append(cur)
            cur, cur_bytes = [], 0
        cur.append(lw)
        cur_bytes += lb
    chunks.append(cur)

    h = x_p
    n_done = 0
    for chunk in chunks:
        flags = [not (n_done + li == len(layers) - 1)
                 for li in range(len(chunk))]
        n_done += len(chunk)
        chunk_w_bytes = sum(_layer_bytes(w, b) for (w, b) in chunk)
        vmem_limit = min(cap, max(_needed(tm, chunk_w_bytes), 32 << 20))
        try:
            h = _run_fused_chunk(chunk, h, flags, apply_relu, tm, vmem_limit,
                                 x.dtype, single_buffer_weights=True)
        except Exception:
            # Buffered(1) unsupported on this jax build -> default pipelining.
            h = _run_fused_chunk(chunk, h, flags, apply_relu, tm, vmem_limit,
                                 x.dtype, single_buffer_weights=False)

    return h[:B, :out_dim]


def init_mlp_params(key, input_dim, output_dim, layer_num=1, hidden_dim=64,
                    dtype=jnp.float32):
    """Deterministic parameter init mimicking the PyTorch module:
       default Linear init (uniform(-1/sqrt(fan_in), 1/sqrt(fan_in))),
       then weight *= 0.001 and bias = 0."""
    params = []
    if layer_num == 1:
        dims = [(input_dim, output_dim)]
    else:
        dims = [(input_dim, hidden_dim)]
        dims += [(hidden_dim, hidden_dim)] * (layer_num - 2)
        dims += [(hidden_dim, output_dim)]
    for (din, dout) in dims:
        key, sub = jax.random.split(key)
        bound = 1.0 / jnp.sqrt(jnp.array(din, dtype))
        # PyTorch weight is (out, in); we store it transposed as (in, out).
        w_t = jax.random.uniform(sub, (din, dout), dtype,
                                 minval=-bound, maxval=bound) * 0.001
        b = jnp.zeros((dout,), dtype)
        params.append((w_t, b))
    return params


if __name__ == "__main__":
    key = jax.random.PRNGKey(0)
    key, xkey = jax.random.split(key)

    batch = 8
    input_dim = 32
    hidden_dim = 64
    output_dim = 16
    layer_num = 3

    x = jax.random.normal(xkey, (batch, input_dim), jnp.float32)
    params = init_mlp_params(key, input_dim, output_dim,
                             layer_num=layer_num, hidden_dim=hidden_dim)

    # Plain-JAX reference (dropout == identity in eval mode, activation=None).
    ref = x
    for (w_t, b) in params:
        ref = ref @ w_t + b

    # f32 compute path (exact parity with the reference).
    prep_f32 = prepare_mlp_params(params, compute_dtype=jnp.float32)
    out_f32 = jax.block_until_ready(mlp_forward(prep_f32, x, activation=None))
    assert out_f32.shape == (batch, output_dim)
    assert jnp.allclose(out_f32, ref, atol=1e-5, rtol=1e-5)

    # bf16-MXU / f32-accumulate path (default; recommended on v6e/v7x) —
    # checked against the f32 reference with a relative-error tolerance.
    prep_bf16 = prepare_mlp_params(params)                 # bf16 weights
    out_bf16 = jax.block_until_ready(mlp_forward(prep_bf16, x, activation=None))
    assert out_bf16.shape == (batch, output_dim)
    scale = float(jnp.max(jnp.abs(ref))) + 1e-30
    rel_err = float(jnp.max(jnp.abs(out_bf16.astype(jnp.float32) - ref))) / scale
    assert bool(jnp.all(jnp.isfinite(out_bf16)))
    assert rel_err < 0.1, f"bf16 path rel err too high: {rel_err}"

    print("KERNEL_OK")
</pallas_src>

<mosaic_0001>
module attributes {stable_mosaic.version = 11 : i64} {
  func.func @_fused_mlp_kernel(%arg0: i32, %arg1: memref<8x32xf32, #tpu.memory_space<vmem>>, %arg2: memref<32x128xf32, #tpu.memory_space<vmem>>, %arg3: memref<1x128xf32, #tpu.memory_space<vmem>>, %arg4: memref<128x128xf32, #tpu.memory_space<vmem>>, %arg5: memref<1x128xf32, #tpu.memory_space<vmem>>, %arg6: memref<128x128xf32, #tpu.memory_space<vmem>>, %arg7: memref<1x128xf32, #tpu.memory_space<vmem>>, %arg8: memref<8x128xf32, #tpu.memory_space<vmem>>) attributes {dimension_semantics = [#tpu.dimension_semantics<parallel>], iteration_bounds = array<i64: 1>, scalar_prefetch = 0 : i64, scratch_operands = 0 : i64, tpu.core_type = #tpu.core_type<tc>, window_params = [{transform_indices = @transform_0, window_bounds = array<i64: 8, 32>}, {pipeline_mode = #tpu.pipeline_mode<synchronous>, transform_indices = @transform_1, window_bounds = array<i64: 32, 128>}, {pipeline_mode = #tpu.pipeline_mode<synchronous>, transform_indices = @transform_2, window_bounds = array<i64: 1, 128>}, {pipeline_mode = #tpu.pipeline_mode<synchronous>, transform_indices = @transform_3, window_bounds = array<i64: 128, 128>}, {pipeline_mode = #tpu.pipeline_mode<synchronous>, transform_indices = @transform_4, window_bounds = array<i64: 1, 128>}, {pipeline_mode = #tpu.pipeline_mode<synchronous>, transform_indices = @transform_5, window_bounds = array<i64: 128, 128>}, {pipeline_mode = #tpu.pipeline_mode<synchronous>, transform_indices = @transform_6, window_bounds = array<i64: 1, 128>}, {transform_indices = @transform_7, window_bounds = array<i64: 8, 128>}]} {
    %c0 = arith.constant 0 : index
    %c0_0 = arith.constant 0 : index
    %0 = vector.load %arg1[%c0, %c0_0] : memref<8x32xf32, #tpu.memory_space<vmem>>, vector<8x32xf32>
    %c0_1 = arith.constant 0 : index
    %c0_2 = arith.constant 0 : index
    %1 = vector.load %arg2[%c0_1, %c0_2] : memref<32x128xf32, #tpu.memory_space<vmem>>, vector<32x128xf32>
    %c0_3 = arith.constant 0 : index
    %c0_4 = arith.constant 0 : index
    %2 = vector.load %arg3[%c0_3, %c0_4] : memref<1x128xf32, #tpu.memory_space<vmem>>, vector<1x128xf32>
    %cst = arith.constant dense<0.000000e+00> : vector<8x128xf32>
    %3 = tpu.matmul %0, %1, %cst {dimension_numbers = #tpu.dot_dimension_numbers<[1], [0], [0], [1], [0, 0, 1, 1], [], []>} : vector<8x32xf32>, vector<32x128xf32>, vector<8x128xf32> -> vector<8x128xf32>
    %4 = vector.broadcast %2 : vector<1x128xf32> to vector<8x128xf32>
    %5 = arith.addf %3, %4 : vector<8x128xf32>
    %c0_5 = arith.constant 0 : index
    %c0_6 = arith.constant 0 : index
    %6 = vector.load %arg4[%c0_5, %c0_6] : memref<128x128xf32, #tpu.memory_space<vmem>>, vector<128x128xf32>
    %c0_7 = arith.constant 0 : index
    %c0_8 = arith.constant 0 : index
    %7 = vector.load %arg5[%c0_7, %c0_8] : memref<1x128xf32, #tpu.memory_space<vmem>>, vector<1x128xf32>
    %cst_9 = arith.constant dense<0.000000e+00> : vector<8x128xf32>
    %8 = tpu.matmul %5, %6, %cst_9 {dimension_numbers = #tpu.dot_dimension_numbers<[1], [0], [0], [1], [0, 0, 1, 1], [], []>} : vector<8x128xf32>, vector<128x128xf32>, vector<8x128xf32> -> vector<8x128xf32>
    %9 = vector.broadcast %7 : vector<1x128xf32> to vector<8x128xf32>
    %10 = arith.addf %8, %9 : vector<8x128xf32>
    %c0_10 = arith.constant 0 : index
    %c0_11 = arith.constant 0 : index
    %11 = vector.load %arg6[%c0_10, %c0_11] : memref<128x128xf32, #tpu.memory_space<vmem>>, vector<128x128xf32>
    %c0_12 = arith.constant 0 : index
    %c0_13 = arith.constant 0 : index
    %12 = vector.load %arg7[%c0_12, %c0_13] : memref<1x128xf32, #tpu.memory_space<vmem>>, vector<1x128xf32>
    %cst_14 = arith.constant dense<0.000000e+00> : vector<8x128xf32>
    %13 = tpu.matmul %10, %11, %cst_14 {dimension_numbers = #tpu.dot_dimension_numbers<[1], [0], [0], [1], [0, 0, 1, 1], [], []>} : vector<8x128xf32>, vector<128x128xf32>, vector<8x128xf32> -> vector<8x128xf32>
    %14 = vector.broadcast %12 : vector<1x128xf32> to vector<8x128xf32>
    %15 = arith.addf %13, %14 : vector<8x128xf32>
    %c0_15 = arith.constant 0 : index
    %c0_16 = arith.constant 0 : index
    %16 = vector.load %arg8[%c0_15, %c0_16] : memref<8x128xf32, #tpu.memory_space<vmem>>, vector<8x128xf32>
    tpu.vector_store %arg8[%c0_15, %c0_16], %15 {strides = array<i32>} : memref<8x128xf32, #tpu.memory_space<vmem>>, vector<8x128xf32>,
    return
  }
  func.func @transform_0(%arg0: i32) -> (i32, i32) {
    %c0_i32 = arith.constant 0 : i32
    %c0_i32_0 = arith.constant 0 : i32
    return %arg0, %c0_i32 : i32, i32
  }
  func.func @transform_1(%arg0: i32) -> (i32, i32) {
    %c0_i32 = arith.constant 0 : i32
    %c0_i32_0 = arith.constant 0 : i32
    %c0_i32_1 = arith.constant 0 : i32
    return %c0_i32, %c0_i32_0 : i32, i32
  }
  func.func @transform_2(%arg0: i32) -> (i32, i32) {
    %c0_i32 = arith.constant 0 : i32
    %c0_i32_0 = arith.constant 0 : i32
    %c0_i32_1 = arith.constant 0 : i32
    return %c0_i32, %c0_i32_0 : i32, i32
  }
  func.func @transform_3(%arg0: i32) -> (i32, i32) {
    %c0_i32 = arith.constant 0 : i32
    %c0_i32_0 = arith.constant 0 : i32
    %c0_i32_1 = arith.constant 0 : i32
    return %c0_i32, %c0_i32_0 : i32, i32
  }
  func.func @transform_4(%arg0: i32) -> (i32, i32) {
    %c0_i32 = arith.constant 0 : i32
    %c0_i32_0 = arith.constant 0 : i32
    %c0_i32_1 = arith.constant 0 : i32
    return %c0_i32, %c0_i32_0 : i32, i32
  }
  func.func @transform_5(%arg0: i32) -> (i32, i32) {
    %c0_i32 = arith.constant 0 : i32
    %c0_i32_0 = arith.constant 0 : i32
    %c0_i32_1 = arith.constant 0 : i32
    return %c0_i32, %c0_i32_0 : i32, i32
  }
  func.func @transform_6(%arg0: i32) -> (i32, i32) {
    %c0_i32 = arith.constant 0 : i32
    %c0_i32_0 = arith.constant 0 : i32
    %c0_i32_1 = arith.constant 0 : i32
    return %c0_i32, %c0_i32_0 : i32, i32
  }
  func.func @transform_7(%arg0: i32) -> (i32, i32) {
    %c0_i32 = arith.constant 0 : i32
    %c0_i32_0 = arith.constant 0 : i32
    return %arg0, %c0_i32 : i32, i32
  }
}

module attributes {stable_mosaic.version = 11 : i64} {
  func.func @_fused_mlp_kernel(%arg0: i32, %arg1: memref<8x32xf32, #tpu.memory_space<vmem>>, %arg2: memref<32x128xf32, #tpu.memory_space<vmem>>, %arg3: memref<1x128xf32, #tpu.memory_space<vmem>>, %arg4: memref<128x128xf32, #tpu.memory_space<vmem>>, %arg5: memref<1x128xf32, #tpu.memory_space<vmem>>, %arg6: memref<128x128xf32, #tpu.memory_space<vmem>>, %arg7: memref<1x128xf32, #tpu.memory_space<vmem>>, %arg8: memref<8x128xf32, #tpu.memory_space<vmem>>) attributes {dimension_semantics = [#tpu.dimension_semantics<parallel>], iteration_bounds = array<i64: 1>, scalar_prefetch = 0 : i64, scratch_operands = 0 : i64, tpu.core_type = #tpu.core_type<tc>, window_params = [{transform_indices = @transform_0, window_bounds = array<i64: 8, 32>}, {pipeline_mode = #tpu.pipeline_mode<synchronous>, transform_indices = @transform_1, window_bounds = array<i64: 32, 128>}, {pipeline_mode = #tpu.pipeline_mode<synchronous>, transform_indices = @transform_2, window_bounds = array<i64: 1, 128>}, {pipeline_mode = #tpu.pipeline_mode<synchronous>, transform_indices = @transform_3, window_bounds = array<i64: 128, 128>}, {pipeline_mode = #tpu.pipeline_mode<synchronous>, transform_indices = @transform_4, window_bounds = array<i64: 1, 128>}, {pipeline_mode = #tpu.pipeline_mode<synchronous>, transform_indices = @transform_5, window_bounds = array<i64: 128, 128>}, {pipeline_mode = #tpu.pipeline_mode<synchronous>, transform_indices = @transform_6, window_bounds = array<i64: 1, 128>}, {transform_indices = @transform_7, window_bounds = array<i64: 8, 128>}]} {
    %c0 = arith.constant 0 : index
    %c0_0 = arith.constant 0 : index
    %0 = vector.load %arg1[%c0, %c0_0] : memref<8x32xf32, #tpu.memory_space<vmem>>, vector<8x32xf32>
    %c0_1 = arith.constant 0 : index
    %c0_2 = arith.constant 0 : index
    %1 = vector.load %arg2[%c0_1, %c0_2] : memref<32x128xf32, #tpu.memory_space<vmem>>, vector<32x128xf32>
    %c0_3 = arith.constant 0 : index
    %c0_4 = arith.constant 0 : index
    %2 = vector.load %arg3[%c0_3, %c0_4] : memref<1x128xf32, #tpu.memory_space<vmem>>, vector<1x128xf32>
    %cst = arith.constant dense<0.000000e+00> : vector<8x128xf32>
    %3 = tpu.matmul %0, %1, %cst {dimension_numbers = #tpu.dot_dimension_numbers<[1], [0], [0], [1], [0, 0, 1, 1], [], []>} : vector<8x32xf32>, vector<32x128xf32>, vector<8x128xf32> -> vector<8x128xf32>
    %4 = vector.broadcast %2 : vector<1x128xf32> to vector<8x128xf32>
    %5 = arith.addf %3, %4 : vector<8x128xf32>
    %c0_5 = arith.constant 0 : index
    %c0_6 = arith.constant 0 : index
    %6 = vector.load %arg4[%c0_5, %c0_6] : memref<128x128xf32, #tpu.memory_space<vmem>>, vector<128x128xf32>
    %c0_7 = arith.constant 0 : index
    %c0_8 = arith.constant 0 : index
    %7 = vector.load %arg5[%c0_7, %c0_8] : memref<1x128xf32, #tpu.memory_space<vmem>>, vector<1x128xf32>
    %cst_9 = arith.constant dense<0.000000e+00> : vector<8x128xf32>
    %8 = tpu.matmul %5, %6, %cst_9 {dimension_numbers = #tpu.dot_dimension_numbers<[1], [0], [0], [1], [0, 0, 1, 1], [], []>} : vector<8x128xf32>, vector<128x128xf32>, vector<8x128xf32> -> vector<8x128xf32>
    %9 = vector.broadcast %7 : vector<1x128xf32> to vector<8x128xf32>
    %10 = arith.addf %8, %9 : vector<8x128xf32>
    %c0_10 = arith.constant 0 : index
    %c0_11 = arith.constant 0 : index
    %11 = vector.load %arg6[%c0_10, %c0_11] : memref<128x128xf32, #tpu.memory_space<vmem>>, vector<128x128xf32>
    %c0_12 = arith.constant 0 : index
    %c0_13 = arith.constant 0 : index
    %12 = vector.load %arg7[%c0_12, %c0_13] : memref<1x128xf32, #tpu.memory_space<vmem>>, vector<1x128xf32>
    %cst_14 = arith.constant dense<0.000000e+00> : vector<8x128xf32>
    %13 = tpu.matmul %10, %11, %cst_14 {dimension_numbers = #tpu.dot_dimension_numbers<[1], [0], [0], [1], [0, 0, 1, 1], [], []>} : vector<8x128xf32>, vector<128x128xf32>, vector<8x128xf32> -> vector<8x128xf32>
    %14 = vector.broadcast %12 : vector<1x128xf32> to vector<8x128xf32>
    %15 = arith.addf %13, %14 : vector<8x128xf32>
    %c0_15 = arith.constant 0 : index
    %c0_16 = arith.constant 0 : index
    %16 = vector.load %arg8[%c0_15, %c0_16] : memref<8x128xf32, #tpu.memory_space<vmem>>, vector<8x128xf32>
    tpu.vector_store %arg8[%c0_15, %c0_16], %15 {strides = array<i32>} : memref<8x128xf32, #tpu.memory_space<vmem>>, vector<8x128xf32>,
    return
  }
  func.func @transform_0(%arg0: i32) -> (i32, i32) {
    %c0_i32 = arith.constant 0 : i32
    %c0_i32_0 = arith.constant 0 : i32
    return %arg0, %c0_i32 : i32, i32
  }
  func.func @transform_1(%arg0: i32) -> (i32, i32) {
    %c0_i32 = arith.constant 0 : i32
    %c0_i32_0 = arith.constant 0 : i32
    %c0_i32_1 = arith.constant 0 : i32
    return %c0_i32, %c0_i32_0 : i32, i32
  }
  func.func @transform_2(%arg0: i32) -> (i32, i32) {
    %c0_i32 = arith.constant 0 : i32
    %c0_i32_0 = arith.constant 0 : i32
    %c0_i32_1 = arith.constant 0 : i32
    return %c0_i32, %c0_i32_0 : i32, i32
  }
  func.func @transform_3(%arg0: i32) -> (i32, i32) {
    %c0_i32 = arith.constant 0 : i32
    %c0_i32_0 = arith.constant 0 : i32
    %c0_i32_1 = arith.constant 0 : i32
    return %c0_i32, %c0_i32_0 : i32, i32
  }
  func.func @transform_4(%arg0: i32) -> (i32, i32) {
    %c0_i32 = arith.constant 0 : i32
    %c0_i32_0 = arith.constant 0 : i32
    %c0_i32_1 = arith.constant 0 : i32
    return %c0_i32, %c0_i32_0 : i32, i32
  }
  func.func @transform_5(%arg0: i32) -> (i32, i32) {
    %c0_i32 = arith.constant 0 : i32
    %c0_i32_0 = arith.constant 0 : i32
    %c0_i32_1 = arith.constant 0 : i32
    return %c0_i32, %c0_i32_0 : i32, i32
  }
  func.func @transform_6(%arg0: i32) -> (i32, i32) {
    %c0_i32 = arith.constant 0 : i32
    %c0_i32_0 = arith.constant 0 : i32
    %c0_i32_1 = arith.constant 0 : i32
    return %c0_i32, %c0_i32_0 : i32, i32
  }
  func.func @transform_7(%arg0: i32) -> (i32, i32) {
    %c0_i32 = arith.constant 0 : i32
    %c0_i32_0 = arith.constant 0 : i32
    return %arg0, %c0_i32 : i32, i32
  }
}

</mosaic_0001>

<llo_original>
// kernel: tpu_custom_call.1
$region0: #{tpu_custom_call.1}
  #allocation0 [shape = 'u32[]', space=smem, size = 0x4, offset = 0x4, fixed_abs, tag = 'smem constant byte address 0x4 - core index']
  #allocation1 [shape = 'u32[144,128]{1,0:T(1,128)}', space=vmem, size = 0x12000, scoped, tag = 'internal scratch']
  %s0 = inlined_call_operand.hbm [shape: f32[8,32], index: 0, kind: input, shape index: {}]
  %s1 = inlined_call_operand.hbm [shape: f32[32,128], index: 1, kind: input, shape index: {}]
  %s2 = inlined_call_operand.vmem [shape: f32[1,128], index: 2, kind: input, shape index: {}]
  %s3 = inlined_call_operand.hbm [shape: f32[128,128], index: 3, kind: input, shape index: {}]
  %s4 = inlined_call_operand.vmem [shape: f32[1,128], index: 4, kind: input, shape index: {}]
  %s5 = inlined_call_operand.hbm [shape: f32[128,128], index: 5, kind: input, shape index: {}]
  %s6 = inlined_call_operand.vmem [shape: f32[1,128], index: 6, kind: input, shape index: {}]
  %s7 = inlined_call_operand.hbm [shape: f32[8,128], index: 7, kind: output, shape index: {}]
  %s8 = sld [smem:[#allocation0]]
  $region54: #{tpu_custom_call.1} parent=0
    _
  %s10 = ssub.s32 1, %s8
  %s11 = scalar_select 0, %s10, %s8
  $region1: #{tpu_custom_call.1} parent=0
    #allocation2 [shape = 'u8[4096]{0}', space=vmem, size = 0x1000, scoped, tag = 'input window, operand 0, single buffered']
    #allocation3 [shape = 's32[1]{0}', space=sflag, size = 0x4, scoped, tag = 'scoped memory for tpu_custom_call.1']
    #allocation4 [shape = 's32[1]{0}', space=sflag, size = 0x4, scoped, tag = 'scoped memory for tpu_custom_call.1']
    #allocation5 [shape = 'u8[16384]{0}', space=vmem, size = 0x4000, scoped, tag = 'input window, operand 1, single buffered']
    #allocation6 [shape = 's32[1]{0}', space=sflag, size = 0x4, scoped, tag = 'scoped memory for tpu_custom_call.1']
    #allocation7 [shape = 'u8[65536]{0}', space=vmem, size = 0x10000, scoped, tag = 'input window, operand 3, single buffered']
    #allocation8 [shape = 'u8[65536]{0}', space=vmem, size = 0x10000, scoped, tag = 'input window, operand 5, single buffered']
    #allocation9 [shape = 's32[1]{0}', space=sflag, size = 0x4, scoped, tag = 'scoped memory for tpu_custom_call.1']
    #allocation10 [shape = 'u8[4096]{0}', space=vmem, size = 0x1000, scoped, tag = 'output window, operand 0, single buffered']
    %12 = vsyncpa [#allocation3], 0
    %13 = vsyncpa [#allocation6], 0
    %14 = vsyncpa [#allocation9], 0
    %15 = vsyncpa [#allocation4], 0
    // Predicated region
    $region2: #{tpu_custom_call.1} parent=1 // pred_check
      _
    $region3: #{tpu_custom_call.1} parent=1 // pred_check_branch
      %17 = sbr.rel (0) target = $region5
    $region4: #{tpu_custom_call.1} parent=1 // pred_region
      %s19 = ssub.s32 128, 128
      %20 = vsyncadd [#allocation3], %s19
      %s22 = sshll.u32 [#allocation2], 4
      %s23 = int_to_ptr.vmem [resolvable:$true] %s22
      %25 = dma.hbm_to_vmem [thread:$0]  %s0, 128, %s23, [#allocation3]
    $region5: #{tpu_custom_call.1} parent=1 // pred_fallthru
      _
    // Predicated region
    $region6: #{tpu_custom_call.1} parent=1 // pred_check
      _
    $region7: #{tpu_custom_call.1} parent=1 // pred_check_branch
      %27 = sbr.rel (0) target = $region9
    $region8: #{tpu_custom_call.1} parent=1 // pred_region
      %s29 = ssub.s32 512, 512
      %30 = vsyncadd [#allocation6], %s29
      %s31 = sshll.u32 [#allocation5], 4
      %s32 = int_to_ptr.vmem [resolvable:$true] %s31
      %37 = dma.hbm_to_vmem [thread:$0]  %s1, 512, %s32, [#allocation6], 128, 128, 8
    $region9: #{tpu_custom_call.1} parent=1 // pred_fallthru
      _
    // Predicated region
    $region10: #{tpu_custom_call.1} parent=1 // pred_check
      _
    $region11: #{tpu_custom_call.1} parent=1 // pred_check_branch
      %39 = sbr.rel (0) target = $region13
    $region12: #{tpu_custom_call.1} parent=1 // pred_region
      _
    $region13: #{tpu_custom_call.1} parent=1 // pred_fallthru
      _
    // Predicated region
    $region14: #{tpu_custom_call.1} parent=1 // pred_check
      _
    $region15: #{tpu_custom_call.1} parent=1 // pred_check_branch
      %41 = sbr.rel (0) target = $region17
    $region16: #{tpu_custom_call.1} parent=1 // pred_region
      %s43 = ssub.s32 2048, 2048
      %44 = vsyncadd [#allocation6], %s43
      %s45 = sshll.u32 [#allocation7], 4
      %s46 = int_to_ptr.vmem [resolvable:$true] %s45
      %51 = dma.hbm_to_vmem [thread:$0]  %s3, 2048, %s46, [#allocation6], 128, 128, 8
    $region17: #{tpu_custom_call.1} parent=1 // pred_fallthru
      _
    // Predicated region
    $region18: #{tpu_custom_call.1} parent=1 // pred_check
      _
    $region19: #{tpu_custom_call.1} parent=1 // pred_check_branch
      %53 = sbr.rel (0) target = $region21
    $region20: #{tpu_custom_call.1} parent=1 // pred_region
      _
    $region21: #{tpu_custom_call.1} parent=1 // pred_fallthru
      _
    // Predicated region
    $region22: #{tpu_custom_call.1} parent=1 // pred_check
      _
    $region23: #{tpu_custom_call.1} parent=1 // pred_check_branch
      %55 = sbr.rel (0) target = $region25
    $region24: #{tpu_custom_call.1} parent=1 // pred_region
      %s57 = ssub.s32 2048, 2048
      %58 = vsyncadd [#allocation9], %s57
      %s59 = sshll.u32 [#allocation8], 4
      %s60 = int_to_ptr.vmem [resolvable:$true] %s59
      %65 = dma.hbm_to_vmem [thread:$0]  %s5, 2048, %s60, [#allocation9], 128, 128, 8
    $region25: #{tpu_custom_call.1} parent=1 // pred_fallthru
      _
    // Predicated region
    $region26: #{tpu_custom_call.1} parent=1 // pred_check
      _
    $region27: #{tpu_custom_call.1} parent=1 // pred_check_branch
      %67 = sbr.rel (0) target = $region29
    $region28: #{tpu_custom_call.1} parent=1 // pred_region
      _
    $region29: #{tpu_custom_call.1} parent=1 // pred_fallthru
      _
    // Predicated region
    $region30: #{tpu_custom_call.1} parent=1 // pred_check
      _
    $region31: #{tpu_custom_call.1} parent=1 // pred_check_branch
      %69 = sbr.rel (0) target = $region33
    $region32: #{tpu_custom_call.1} parent=1 // pred_region
      %70 = dma.done [#allocation3], 128
    $region33: #{tpu_custom_call.1} parent=1 // pred_fallthru
      _
    // Predicated region
    $region34: #{tpu_custom_call.1} parent=1 // pred_check
      _
    $region35: #{tpu_custom_call.1} parent=1 // pred_check_branch
      %72 = sbr.rel (0) target = $region37
    $region36: #{tpu_custom_call.1} parent=1 // pred_region
      %73 = dma.done [#allocation6], 512
    $region37: #{tpu_custom_call.1} parent=1 // pred_fallthru
      _
    // Predicated region
    $region38: #{tpu_custom_call.1} parent=1 // pred_check
      _
    $region39: #{tpu_custom_call.1} parent=1 // pred_check_branch
      %75 = sbr.rel (0) target = $region41
    $region40: #{tpu_custom_call.1} parent=1 // pred_region
      %76 = dma.done [#allocation6], 2048
    $region41: #{tpu_custom_call.1} parent=1 // pred_fallthru
      _
    // Predicated region
    $region42: #{tpu_custom_call.1} parent=1 // pred_check
      _
    $region43: #{tpu_custom_call.1} parent=1 // pred_check_branch
      %78 = sbr.rel (0) target = $region45
    $region44: #{tpu_custom_call.1} parent=1 // pred_region
      %79 = dma.done [#allocation9], 2048
    $region45: #{tpu_custom_call.1} parent=1 // pred_fallthru
      _
    %v80 = vld [vmem:[#allocation2] sm:$0xff]
    %v81 = vld [vmem:[#allocation5] sm:$0xff]
    %v82 = vld [vmem:[#allocation5 + $0x8] sm:$0xff]
    %v83 = vld [vmem:[#allocation5 + $0x10] sm:$0xff]
    %v84 = vld [vmem:[#allocation5 + $0x18] sm:$0xff]
    %v85 = vld [vmem:[%s2] sm:$0x1]
    %v87 = vlaneseq
    %v88 = vshrl.u32 %v87, 7
    %v89 = vsub.s32 0, %v88
    %v90 = vrot.slane %v85, %v89
    %vm92 = vcmask 261120
    %v94 = vsel %vm92, %v80, 0
    %96 = vmatprep.subr.mxu0 0.0
    %97 = vmatpush1.msra.mxu0 0.0
    %98 = vmatprep.subr.mxu0 0.0
    %99 = vmatpush1.msra.mxu0 0.0
    %100 = vmatprep.subr.mxu0 0.0
    %101 = vmatpush1.msra.mxu0 0.0
    %102 = vmatprep.subr.mxu0 0.0
    %103 = vmatpush1.msra.mxu0 0.0
    %104 = vmatprep.subr.mxu0 0.0
    %105 = vmatpush1.msra.mxu0 0.0
    %106 = vmatprep.subr.mxu0 0.0
    %107 = vmatpush1.msra.mxu0 0.0
    %108 = vmatprep.subr.mxu0 0.0
    %109 = vmatpush1.msra.mxu0 0.0
    %110 = vmatprep.subr.mxu0 0.0
    %111 = vmatpush1.msra.mxu0 0.0
    %112 = vmatprep.subr.mxu0 0.0
    %113 = vmatpush1.msra.mxu0 0.0
    %114 = vmatprep.subr.mxu0 0.0
    %115 = vmatpush1.msra.mxu0 0.0
    %116 = vmatprep.subr.mxu0 0.0
    %117 = vmatpush1.msra.mxu0 0.0
    %118 = vmatprep.subr.mxu0 0.0
    %119 = vmatpush1.msra.mxu0 0.0
    %120 = vmatprep.subr.mxu0 0.0
    %121 = vmatpush1.msra.mxu0 %v84
    %122 = vmatprep.subr.mxu0 0.0
    %123 = vmatpush1.msra.mxu0 %v83
    %124 = vmatprep.subr.mxu0 0.0
    %125 = vmatpush1.msra.mxu0 %v82
    %126 = vmatprep.subr.mxu0 0.0
    %127 = vmatpush1.msra.mxu0 %v81
    %128 = vmatprep.subr.mxu0 0.0
    %129 = vmatpush2.msra.mxu0 0.0
    %130 = vmatprep.subr.mxu0 0.0
    %131 = vmatpush2.msra.mxu0 0.0
    %132 = vmatprep.subr.mxu0 0.0
    %133 = vmatpush2.msra.mxu0 0.0
    %134 = vmatprep.subr.mxu0 0.0
    %135 = vmatpush2.msra.mxu0 0.0
    %136 = vmatprep.subr.mxu0 0.0
    %137 = vmatpush2.msra.mxu0 0.0
    %138 = vmatprep.subr.mxu0 0.0
    %139 = vmatpush2.msra.mxu0 0.0
    %140 = vmatprep.subr.mxu0 0.0
    %141 = vmatpush2.msra.mxu0 0.0
    %142 = vmatprep.subr.mxu0 0.0
    %143 = vmatpush2.msra.mxu0 0.0
    %144 = vmatprep.subr.mxu0 0.0
    %145 = vmatpush2.msra.mxu0 0.0
    %146 = vmatprep.subr.mxu0 0.0
    %147 = vmatpush2.msra.mxu0 0.0
    %148 = vmatprep.subr.mxu0 0.0
    %149 = vmatpush2.msra.mxu0 0.0
    %150 = vmatprep.subr.mxu0 0.0
    %151 = vmatpush2.msra.mxu0 0.0
    %152 = vmatprep.subr.mxu0 0.0
    %153 = vmatpush2.msra.mxu0 0.0
    %154 = vmatprep.subr.mxu0 0.0
    %155 = vmatpush2.msra.mxu0 0.0
    %156 = vmatprep.subr.mxu0 0.0
    %157 = vmatpush2.msra.mxu0 0.0
    %158 = vmatprep.subr.mxu0 0.0
    %159 = vmatpush2.msra.mxu0 0.0
    %160 = vmatprep.mubr.f32.mxu0 0.0
    %161 = vmatmul.mubr.f32.gmra.mxu0 %v94
    %v162 = vpop.f32.mrf.mxu0
    %v163 = vadd.f32 %v90, %v162
    %v164 = vpop.f32.mrf.mxu0
    %165 = vdwg.mxu0
    %v166 = vld [vmem:[#allocation7] sm:$0xff]
    %v167 = vld [vmem:[#allocation7 + $0x8] sm:$0xff]
    %v168 = vld [vmem:[#allocation7 + $0x10] sm:$0xff]
    %v169 = vld [vmem:[#allocation7 + $0x18] sm:$0xff]
    %v170 = vld [vmem:[#allocation7 + $0x20] sm:$0xff]
    %v171 = vld [vmem:[#allocation7 + $0x28] sm:$0xff]
    %v172 = vld [vmem:[#allocation7 + $0x30] sm:$0xff]
    %v173 = vld [vmem:[#allocation7 + $0x38] sm:$0xff]
    %v174 = vld [vmem:[#allocation7 + $0x40] sm:$0xff]
    %v175 = vld [vmem:[#allocation7 + $0x48] sm:$0xff]
    %v176 = vld [vmem:[#allocation7 + $0x50] sm:$0xff]
    %v177 = vld [vmem:[#allocation7 + $0x58] sm:$0xff]
    %v178 = vld [vmem:[#allocation7 + $0x60] sm:$0xff]
    %v179 = vld [vmem:[#allocation7 + $0x68] sm:$0xff]
    %v180 = vld [vmem:[#allocation7 + $0x70] sm:$0xff]
    %v181 = vld [vmem:[#allocation7 + $0x78] sm:$0xff]
    %v182 = vld [vmem:[%s4] sm:$0x1]
    %v184 = vlaneseq
    %v185 = vshrl.u32 %v184, 7
    %v186 = vsub.s32 0, %v185
    %v187 = vrot.slane %v182, %v186
    %189 = vmatprep.subr.mxu0 0.0
    %190 = vmatpush1.msra.mxu0 %v181
    %191 = vmatprep.subr.mxu0 0.0
    %192 = vmatpush1.msra.mxu0 %v180
    %193 = vmatprep.subr.mxu0 0.0
    %194 = vmatpush1.msra.mxu0 %v179
    %195 = vmatprep.subr.mxu0 0.0
    %196 = vmatpush1.msra.mxu0 %v178
    %197 = vmatprep.subr.mxu0 0.0
    %198 = vmatpush1.msra.mxu0 %v177
    %199 = vmatprep.subr.mxu0 0.0
    %200 = vmatpush1.msra.mxu0 %v176
    %201 = vmatprep.subr.mxu0 0.0
    %202 = vmatpush1.msra.mxu0 %v175
    %203 = vmatprep.subr.mxu0 0.0
    %204 = vmatpush1.msra.mxu0 %v174
    %205 = vmatprep.subr.mxu0 0.0
    %206 = vmatpush1.msra.mxu0 %v173
    %207 = vmatprep.subr.mxu0 0.0
    %208 = vmatpush1.msra.mxu0 %v172
    %209 = vmatprep.subr.mxu0 0.0
    %210 = vmatpush1.msra.mxu0 %v171
    %211 = vmatprep.subr.mxu0 0.0
    %212 = vmatpush1.msra.mxu0 %v170
    %213 = vmatprep.subr.mxu0 0.0
    %214 = vmatpush1.msra.mxu0 %v169
    %215 = vmatprep.subr.mxu0 0.0
    %216 = vmatpush1.msra.mxu0 %v168
    %217 = vmatprep.subr.mxu0 0.0
    %218 = vmatpush1.msra.mxu0 %v167
    %219 = vmatprep.subr.mxu0 0.0
    %220 = vmatpush1.msra.mxu0 %v166
    %221 = vmatprep.subr.mxu0 0.0
    %222 = vmatpush2.msra.mxu0 0.0
    %223 = vmatprep.subr.mxu0 0.0
    %224 = vmatpush2.msra.mxu0 0.0
    %225 = vmatprep.subr.mxu0 0.0
    %226 = vmatpush2.msra.mxu0 0.0
    %227 = vmatprep.subr.mxu0 0.0
    %228 = vmatpush2.msra.mxu0 0.0
    %229 = vmatprep.subr.mxu0 0.0
    %230 = vmatpush2.msra.mxu0 0.0
    %231 = vmatprep.subr.mxu0 0.0
    %232 = vmatpush2.msra.mxu0 0.0
    %233 = vmatprep.subr.mxu0 0.0
    %234 = vmatpush2.msra.mxu0 0.0
    %235 = vmatprep.subr.mxu0 0.0
    %236 = vmatpush2.msra.mxu0 0.0
    %237 = vmatprep.subr.mxu0 0.0
    %238 = vmatpush2.msra.mxu0 0.0
    %239 = vmatprep.subr.mxu0 0.0
    %240 = vmatpush2.msra.mxu0 0.0
    %241 = vmatprep.subr.mxu0 0.0
    %242 = vmatpush2.msra.mxu0 0.0
    %243 = vmatprep.subr.mxu0 0.0
    %244 = vmatpush2.msra.mxu0 0.0
    %245 = vmatprep.subr.mxu0 0.0
    %246 = vmatpush2.msra.mxu0 0.0
    %247 = vmatprep.subr.mxu0 0.0
    %248 = vmatpush2.msra.mxu0 0.0
    %249 = vmatprep.subr.mxu0 0.0
    %250 = vmatpush2.msra.mxu0 0.0
    %251 = vmatprep.subr.mxu0 0.0
    %252 = vmatpush2.msra.mxu0 0.0
    %253 = vmatprep.mubr.f32.mxu0 0.0
    %254 = vmatmul.mubr.f32.gmra.mxu0 %v163
    %v255 = vpop.f32.mrf.mxu0
    %v256 = vadd.f32 %v187, %v255
    %v257 = vpop.f32.mrf.mxu0
    %258 = vdwg.mxu0
    %v259 = vld [vmem:[#allocation8] sm:$0xff]
    %v260 = vld [vmem:[#allocation8 + $0x8] sm:$0xff]
    %v261 = vld [vmem:[#allocation8 + $0x10] sm:$0xff]
    %v262 = vld [vmem:[#allocation8 + $0x18] sm:$0xff]
    %v263 = vld [vmem:[#allocation8 + $0x20] sm:$0xff]
    %v264 = vld [vmem:[#allocation8 + $0x28] sm:$0xff]
    %v265 = vld [vmem:[#allocation8 + $0x30] sm:$0xff]
    %v266 = vld [vmem:[#allocation8 + $0x38] sm:$0xff]
    %v267 = vld [vmem:[#allocation8 + $0x40] sm:$0xff]
    %v268 = vld [vmem:[#allocation8 + $0x48] sm:$0xff]
    %v269 = vld [vmem:[#allocation8 + $0x50] sm:$0xff]
    %v270 = vld [vmem:[#allocation8 + $0x58] sm:$0xff]
    %v271 = vld [vmem:[#allocation8 + $0x60] sm:$0xff]
    %v272 = vld [vmem:[#allocation8 + $0x68] sm:$0xff]
    %v273 = vld [vmem:[#allocation8 + $0x70] sm:$0xff]
    %v274 = vld [vmem:[#allocation8 + $0x78] sm:$0xff]
    %v275 = vld [vmem:[%s6] sm:$0x1]
    %v277 = vlaneseq
    %v278 = vshrl.u32 %v277, 7
    %v279 = vsub.s32 0, %v278
    %v280 = vrot.slane %v275, %v279
    %282 = vmatprep.subr.mxu0 0.0
    %283 = vmatpush1.msra.mxu0 %v274
    %284 = vmatprep.subr.mxu0 0.0
    %285 = vmatpush1.msra.mxu0 %v273
    %286 = vmatprep.subr.mxu0 0.0
    %287 = vmatpush1.msra.mxu0 %v272
    %288 = vmatprep.subr.mxu0 0.0
    %289 = vmatpush1.msra.mxu0 %v271
    %290 = vmatprep.subr.mxu0 0.0
    %291 = vmatpush1.msra.mxu0 %v270
    %292 = vmatprep.subr.mxu0 0.0
    %293 = vmatpush1.msra.mxu0 %v269
    %294 = vmatprep.subr.mxu0 0.0
    %295 = vmatpush1.msra.mxu0 %v268
    %296 = vmatprep.subr.mxu0 0.0
    %297 = vmatpush1.msra.mxu0 %v267
    %298 = vmatprep.subr.mxu0 0.0
    %299 = vmatpush1.msra.mxu0 %v266
    %300 = vmatprep.subr.mxu0 0.0
    %301 = vmatpush1.msra.mxu0 %v265
    %302 = vmatprep.subr.mxu0 0.0
    %303 = vmatpush1.msra.mxu0 %v264
    %304 = vmatprep.subr.mxu0 0.0
    %305 = vmatpush1.msra.mxu0 %v263
    %306 = vmatprep.subr.mxu0 0.0
    %307 = vmatpush1.msra.mxu0 %v262
    %308 = vmatprep.subr.mxu0 0.0
    %309 = vmatpush1.msra.mxu0 %v261
    %310 = vmatprep.subr.mxu0 0.0
    %311 = vmatpush1.msra.mxu0 %v260
    %312 = vmatprep.subr.mxu0 0.0
    %313 = vmatpush1.msra.mxu0 %v259
    %314 = vmatprep.subr.mxu0 0.0
    %315 = vmatpush2.msra.mxu0 0.0
    %316 = vmatprep.subr.mxu0 0.0
    %317 = vmatpush2.msra.mxu0 0.0
    %318 = vmatprep.subr.mxu0 0.0
    %319 = vmatpush2.msra.mxu0 0.0
    %320 = vmatprep.subr.mxu0 0.0
    %321 = vmatpush2.msra.mxu0 0.0
    %322 = vmatprep.subr.mxu0 0.0
    %323 = vmatpush2.msra.mxu0 0.0
    %324 = vmatprep.subr.mxu0 0.0
    %325 = vmatpush2.msra.mxu0 0.0
    %326 = vmatprep.subr.mxu0 0.0
    %327 = vmatpush2.msra.mxu0 0.0
    %328 = vmatprep.subr.mxu0 0.0
    %329 = vmatpush2.msra.mxu0 0.0
    %330 = vmatprep.subr.mxu0 0.0
    %331 = vmatpush2.msra.mxu0 0.0
    %332 = vmatprep.subr.mxu0 0.0
    %333 = vmatpush2.msra.mxu0 0.0
    %334 = vmatprep.subr.mxu0 0.0
    %335 = vmatpush2.msra.mxu0 0.0
    %336 = vmatprep.subr.mxu0 0.0
    %337 = vmatpush2.msra.mxu0 0.0
    %338 = vmatprep.subr.mxu0 0.0
    %339 = vmatpush2.msra.mxu0 0.0
    %340 = vmatprep.subr.mxu0 0.0
    %341 = vmatpush2.msra.mxu0 0.0
    %342 = vmatprep.subr.mxu0 0.0
    %343 = vmatpush2.msra.mxu0 0.0
    %344 = vmatprep.subr.mxu0 0.0
    %345 = vmatpush2.msra.mxu0 0.0
    %346 = vmatprep.mubr.f32.mxu0 0.0
    %347 = vmatmul.mubr.f32.gmra.mxu0 %v256
    %v348 = vpop.f32.mrf.mxu0
    %v349 = vadd.f32 %v280, %v348
    %v350 = vpop.f32.mrf.mxu0
    %351 = vdwg.mxu0
    %352 = vst [vmem:[#allocation10] sm:$0xff] %v349
    // Predicated region
    $region46: #{tpu_custom_call.1} parent=1 // pred_check
      _
    $region47: #{tpu_custom_call.1} parent=1 // pred_check_branch
      %354 = sbr.rel (0) target = $region49
    $region48: #{tpu_custom_call.1} parent=1 // pred_region
      %s356 = ssub.s32 128, 128
      %357 = vsyncadd [#allocation4], %s356
      %s359 = sshll.u32 [#allocation10], 4
      %s360 = int_to_ptr.vmem [resolvable:$true] %s359
      %362 = dma.vmem_to_hbm [thread:$0]  %s360, 128, %s7, [#allocation4]
    $region49: #{tpu_custom_call.1} parent=1 // pred_fallthru
      _
    // Predicated region
    $region50: #{tpu_custom_call.1} parent=1 // pred_check
      _
    $region51: #{tpu_custom_call.1} parent=1 // pred_check_branch
      %364 = sbr.rel (0) target = $region53
    $region52: #{tpu_custom_call.1} parent=1 // pred_region
      %365 = dma.done [#allocation4], 128
    $region53: #{tpu_custom_call.1} parent=1 // pred_fallthru
      _
    %366 = vsyncpa [#allocation3], 1
    %367 = vsyncpa [#allocation6], 1
    %368 = vsyncpa [#allocation9], 1
    %369 = vsyncpa [#allocation4], 1

// kernel: tpu_custom_call.1
$region0: #{tpu_custom_call.1}
  #allocation0 [shape = 'u32[]', space=smem, size = 0x4, offset = 0x4, fixed_abs, tag = 'smem constant byte address 0x4 - core index']
  #allocation1 [shape = 'u32[144,128]{1,0:T(1,128)}', space=vmem, size = 0x12000, scoped, tag = 'internal scratch']
  %s0 = inlined_call_operand.hbm [shape: f32[8,32], index: 0, kind: input, shape index: {}]
  %s1 = inlined_call_operand.hbm [shape: f32[32,128], index: 1, kind: input, shape index: {}]
  %s2 = inlined_call_operand.vmem [shape: f32[1,128], index: 2, kind: input, shape index: {}]
  %s3 = inlined_call_operand.hbm [shape: f32[128,128], index: 3, kind: input, shape index: {}]
  %s4 = inlined_call_operand.vmem [shape: f32[1,128], index: 4, kind: input, shape index: {}]
  %s5 = inlined_call_operand.hbm [shape: f32[128,128], index: 5, kind: input, shape index: {}]
  %s6 = inlined_call_operand.vmem [shape: f32[1,128], index: 6, kind: input, shape index: {}]
  %s7 = inlined_call_operand.hbm [shape: f32[8,128], index: 7, kind: output, shape index: {}]
  %s8 = sld [smem:[#allocation0]]
  $region54: #{tpu_custom_call.1} parent=0
    _
  %s10 = ssub.s32 1, %s8
  %s11 = scalar_select 0, %s10, %s8
  $region1: #{tpu_custom_call.1} parent=0
    #allocation2 [shape = 'u8[4096]{0}', space=vmem, size = 0x1000, scoped, tag = 'input window, operand 0, single buffered']
    #allocation3 [shape = 's32[1]{0}', space=sflag, size = 0x4, scoped, tag = 'scoped memory for tpu_custom_call.1']
    #allocation4 [shape = 's32[1]{0}', space=sflag, size = 0x4, scoped, tag = 'scoped memory for tpu_custom_call.1']
    #allocation5 [shape = 'u8[16384]{0}', space=vmem, size = 0x4000, scoped, tag = 'input window, operand 1, single buffered']
    #allocation6 [shape = 's32[1]{0}', space=sflag, size = 0x4, scoped, tag = 'scoped memory for tpu_custom_call.1']
    #allocation7 [shape = 'u8[65536]{0}', space=vmem, size = 0x10000, scoped, tag = 'input window, operand 3, single buffered']
    #allocation8 [shape = 'u8[65536]{0}', space=vmem, size = 0x10000, scoped, tag = 'input window, operand 5, single buffered']
    #allocation9 [shape = 's32[1]{0}', space=sflag, size = 0x4, scoped, tag = 'scoped memory for tpu_custom_call.1']
    #allocation10 [shape = 'u8[4096]{0}', space=vmem, size = 0x1000, scoped, tag = 'output window, operand 0, single buffered']
    %12 = vsyncpa [#allocation3], 0
    %13 = vsyncpa [#allocation6], 0
    %14 = vsyncpa [#allocation9], 0
    %15 = vsyncpa [#allocation4], 0
    // Predicated region
    $region2: #{tpu_custom_call.1} parent=1 // pred_check
      _
    $region3: #{tpu_custom_call.1} parent=1 // pred_check_branch
      %17 = sbr.rel (0) target = $region5
    $region4: #{tpu_custom_call.1} parent=1 // pred_region
      %s19 = ssub.s32 128, 128
      %20 = vsyncadd [#allocation3], %s19
      %s22 = sshll.u32 [#allocation2], 4
      %s23 = int_to_ptr.vmem [resolvable:$true] %s22
      %25 = dma.hbm_to_vmem [thread:$0]  %s0, 128, %s23, [#allocation3]
    $region5: #{tpu_custom_call.1} parent=1 // pred_fallthru
      _
    // Predicated region
    $region6: #{tpu_custom_call.1} parent=1 // pred_check
      _
    $region7: #{tpu_custom_call.1} parent=1 // pred_check_branch
      %27 = sbr.rel (0) target = $region9
    $region8: #{tpu_custom_call.1} parent=1 // pred_region
      %s29 = ssub.s32 512, 512
      %30 = vsyncadd [#allocation6], %s29
      %s31 = sshll.u32 [#allocation5], 4
      %s32 = int_to_ptr.vmem [resolvable:$true] %s31
      %37 = dma.hbm_to_vmem [thread:$0]  %s1, 512, %s32, [#allocation6], 128, 128, 8
    $region9: #{tpu_custom_call.1} parent=1 // pred_fallthru
      _
    // Predicated region
    $region10: #{tpu_custom_call.1} parent=1 // pred_check
      _
    $region11: #{tpu_custom_call.1} parent=1 // pred_check_branch
      %39 = sbr.rel (0) target = $region13
    $region12: #{tpu_custom_call.1} parent=1 // pred_region
      _
    $region13: #{tpu_custom_call.1} parent=1 // pred_fallthru
      _
    // Predicated region
    $region14: #{tpu_custom_call.1} parent=1 // pred_check
      _
    $region15: #{tpu_custom_call.1} parent=1 // pred_check_branch
      %41 = sbr.rel (0) target = $region17
    $region16: #{tpu_custom_call.1} parent=1 // pred_region
      %s43 = ssub.s32 2048, 2048
      %44 = vsyncadd [#allocation6], %s43
      %s45 = sshll.u32 [#allocation7], 4
      %s46 = int_to_ptr.vmem [resolvable:$true] %s45
      %51 = dma.hbm_to_vmem [thread:$0]  %s3, 2048, %s46, [#allocation6], 128, 128, 8
    $region17: #{tpu_custom_call.1} parent=1 // pred_fallthru
      _
    // Predicated region
    $region18: #{tpu_custom_call.1} parent=1 // pred_check
      _
    $region19: #{tpu_custom_call.1} parent=1 // pred_check_branch
      %53 = sbr.rel (0) target = $region21
    $region20: #{tpu_custom_call.1} parent=1 // pred_region
      _
    $region21: #{tpu_custom_call.1} parent=1 // pred_fallthru
      _
    // Predicated region
    $region22: #{tpu_custom_call.1} parent=1 // pred_check
      _
    $region23: #{tpu_custom_call.1} parent=1 // pred_check_branch
      %55 = sbr.rel (0) target = $region25
    $region24: #{tpu_custom_call.1} parent=1 // pred_region
      %s57 = ssub.s32 2048, 2048
      %58 = vsyncadd [#allocation9], %s57
      %s59 = sshll.u32 [#allocation8], 4
      %s60 = int_to_ptr.vmem [resolvable:$true] %s59
      %65 = dma.hbm_to_vmem [thread:$0]  %s5, 2048, %s60, [#allocation9], 128, 128, 8
    $region25: #{tpu_custom_call.1} parent=1 // pred_fallthru
      _
    // Predicated region
    $region26: #{tpu_custom_call.1} parent=1 // pred_check
      _
    $region27: #{tpu_custom_call.1} parent=1 // pred_check_branch
      %67 = sbr.rel (0) target = $region29
    $region28: #{tpu_custom_call.1} parent=1 // pred_region
      _
    $region29: #{tpu_custom_call.1} parent=1 // pred_fallthru
      _
    // Predicated region
    $region30: #{tpu_custom_call.1} parent=1 // pred_check
      _
    $region31: #{tpu_custom_call.1} parent=1 // pred_check_branch
      %69 = sbr.rel (0) target = $region33
    $region32: #{tpu_custom_call.1} parent=1 // pred_region
      %70 = dma.done [#allocation3], 128
    $region33: #{tpu_custom_call.1} parent=1 // pred_fallthru
      _
    // Predicated region
    $region34: #{tpu_custom_call.1} parent=1 // pred_check
      _
    $region35: #{tpu_custom_call.1} parent=1 // pred_check_branch
      %72 = sbr.rel (0) target = $region37
    $region36: #{tpu_custom_call.1} parent=1 // pred_region
      %73 = dma.done [#allocation6], 512
    $region37: #{tpu_custom_call.1} parent=1 // pred_fallthru
      _
    // Predicated region
    $region38: #{tpu_custom_call.1} parent=1 // pred_check
      _
    $region39: #{tpu_custom_call.1} parent=1 // pred_check_branch
      %75 = sbr.rel (0) target = $region41
    $region40: #{tpu_custom_call.1} parent=1 // pred_region
      %76 = dma.done [#allocation6], 2048
    $region41: #{tpu_custom_call.1} parent=1 // pred_fallthru
      _
    // Predicated region
    $region42: #{tpu_custom_call.1} parent=1 // pred_check
      _
    $region43: #{tpu_custom_call.1} parent=1 // pred_check_branch
      %78 = sbr.rel (0) target = $region45
    $region44: #{tpu_custom_call.1} parent=1 // pred_region
      %79 = dma.done [#allocation9], 2048
    $region45: #{tpu_custom_call.1} parent=1 // pred_fallthru
      _
    %v80 = vld [vmem:[#allocation2] sm:$0xff]
    %v81 = vld [vmem:[#allocation5] sm:$0xff]
    %v82 = vld [vmem:[#allocation5 + $0x8] sm:$0xff]
    %v83 = vld [vmem:[#allocation5 + $0x10] sm:$0xff]
    %v84 = vld [vmem:[#allocation5 + $0x18] sm:$0xff]
    %v85 = vld [vmem:[%s2] sm:$0x1]
    %v87 = vlaneseq
    %v88 = vshrl.u32 %v87, 7
    %v89 = vsub.s32 0, %v88
    %v90 = vrot.slane %v85, %v89
    %vm92 = vcmask 261120
    %v94 = vsel %vm92, %v80, 0
    %96 = vmatprep.subr.mxu0 0.0
    %97 = vmatpush1.msra.mxu0 0.0
    %98 = vmatprep.subr.mxu0 0.0
    %99 = vmatpush1.msra.mxu0 0.0
    %100 = vmatprep.subr.mxu0 0.0
    %101 = vmatpush1.msra.mxu0 0.0
    %102 = vmatprep.subr.mxu0 0.0
    %103 = vmatpush1.msra.mxu0 0.0
    %104 = vmatprep.subr.mxu0 0.0
    %105 = vmatpush1.msra.mxu0 0.0
    %106 = vmatprep.subr.mxu0 0.0
    %107 = vmatpush1.msra.mxu0 0.0
    %108 = vmatprep.subr.mxu0 0.0
    %109 = vmatpush1.msra.mxu0 0.0
    %110 = vmatprep.subr.mxu0 0.0
    %111 = vmatpush1.msra.mxu0 0.0
    %112 = vmatprep.subr.mxu0 0.0
    %113 = vmatpush1.msra.mxu0 0.0
    %114 = vmatprep.subr.mxu0 0.0
    %115 = vmatpush1.msra.mxu0 0.0
    %116 = vmatprep.subr.mxu0 0.0
    %117 = vmatpush1.msra.mxu0 0.0
    %118 = vmatprep.subr.mxu0 0.0
    %119 = vmatpush1.msra.mxu0 0.0
    %120 = vmatprep.subr.mxu0 0.0
    %121 = vmatpush1.msra.mxu0 %v84
    %122 = vmatprep.subr.mxu0 0.0
    %123 = vmatpush1.msra.mxu0 %v83
    %124 = vmatprep.subr.mxu0 0.0
    %125 = vmatpush1.msra.mxu0 %v82
    %126 = vmatprep.subr.mxu0 0.0
    %127 = vmatpush1.msra.mxu0 %v81
    %128 = vmatprep.subr.mxu0 0.0
    %129 = vmatpush2.msra.mxu0 0.0
    %130 = vmatprep.subr.mxu0 0.0
    %131 = vmatpush2.msra.mxu0 0.0
    %132 = vmatprep.subr.mxu0 0.0
    %133 = vmatpush2.msra.mxu0 0.0
    %134 = vmatprep.subr.mxu0 0.0
    %135 = vmatpush2.msra.mxu0 0.0
    %136 = vmatprep.subr.mxu0 0.0
    %137 = vmatpush2.msra.mxu0 0.0
    %138 = vmatprep.subr.mxu0 0.0
    %139 = vmatpush2.msra.mxu0 0.0
    %140 = vmatprep.subr.mxu0 0.0
    %141 = vmatpush2.msra.mxu0 0.0
    %142 = vmatprep.subr.mxu0 0.0
    %143 = vmatpush2.msra.mxu0 0.0
    %144 = vmatprep.subr.mxu0 0.0
    %145 = vmatpush2.msra.mxu0 0.0
    %146 = vmatprep.subr.mxu0 0.0
    %147 = vmatpush2.msra.mxu0 0.0
    %148 = vmatprep.subr.mxu0 0.0
    %149 = vmatpush2.msra.mxu0 0.0
    %150 = vmatprep.subr.mxu0 0.0
    %151 = vmatpush2.msra.mxu0 0.0
    %152 = vmatprep.subr.mxu0 0.0
    %153 = vmatpush2.msra.mxu0 0.0
    %154 = vmatprep.subr.mxu0 0.0
    %155 = vmatpush2.msra.mxu0 0.0
    %156 = vmatprep.subr.mxu0 0.0
    %157 = vmatpush2.msra.mxu0 0.0
    %158 = vmatprep.subr.mxu0 0.0
    %159 = vmatpush2.msra.mxu0 0.0
    %160 = vmatprep.mubr.f32.mxu0 0.0
    %161 = vmatmul.mubr.f32.gmra.mxu0 %v94
    %v162 = vpop.f32.mrf.mxu0
    %v163 = vadd.f32 %v90, %v162
    %v164 = vpop.f32.mrf.mxu0
    %165 = vdwg.mxu0
    %v166 = vld [vmem:[#allocation7] sm:$0xff]
    %v167 = vld [vmem:[#allocation7 + $0x8] sm:$0xff]
    %v168 = vld [vmem:[#allocation7 + $0x10] sm:$0xff]
    %v169 = vld [vmem:[#allocation7 + $0x18] sm:$0xff]
    %v170 = vld [vmem:[#allocation7 + $0x20] sm:$0xff]
    %v171 = vld [vmem:[#allocation7 + $0x28] sm:$0xff]
    %v172 = vld [vmem:[#allocation7 + $0x30] sm:$0xff]
    %v173 = vld [vmem:[#allocation7 + $0x38] sm:$0xff]
    %v174 = vld [vmem:[#allocation7 + $0x40] sm:$0xff]
    %v175 = vld [vmem:[#allocation7 + $0x48] sm:$0xff]
    %v176 = vld [vmem:[#allocation7 + $0x50] sm:$0xff]
    %v177 = vld [vmem:[#allocation7 + $0x58] sm:$0xff]
    %v178 = vld [vmem:[#allocation7 + $0x60] sm:$0xff]
    %v179 = vld [vmem:[#allocation7 + $0x68] sm:$0xff]
    %v180 = vld [vmem:[#allocation7 + $0x70] sm:$0xff]
    %v181 = vld [vmem:[#allocation7 + $0x78] sm:$0xff]
    %v182 = vld [vmem:[%s4] sm:$0x1]
    %v184 = vlaneseq
    %v185 = vshrl.u32 %v184, 7
    %v186 = vsub.s32 0, %v185
    %v187 = vrot.slane %v182, %v186
    %189 = vmatprep.subr.mxu0 0.0
    %190 = vmatpush1.msra.mxu0 %v181
    %191 = vmatprep.subr.mxu0 0.0
    %192 = vmatpush1.msra.mxu0 %v180
    %193 = vmatprep.subr.mxu0 0.0
    %194 = vmatpush1.msra.mxu0 %v179
    %195 = vmatprep.subr.mxu0 0.0
    %196 = vmatpush1.msra.mxu0 %v178
    %197 = vmatprep.subr.mxu0 0.0
    %198 = vmatpush1.msra.mxu0 %v177
    %199 = vmatprep.subr.mxu0 0.0
    %200 = vmatpush1.msra.mxu0 %v176
    %201 = vmatprep.subr.mxu0 0.0
    %202 = vmatpush1.msra.mxu0 %v175
    %203 = vmatprep.subr.mxu0 0.0
    %204 = vmatpush1.msra.mxu0 %v174
    %205 = vmatprep.subr.mxu0 0.0
    %206 = vmatpush1.msra.mxu0 %v173
    %207 = vmatprep.subr.mxu0 0.0
    %208 = vmatpush1.msra.mxu0 %v172
    %209 = vmatprep.subr.mxu0 0.0
    %210 = vmatpush1.msra.mxu0 %v171
    %211 = vmatprep.subr.mxu0 0.0
    %212 = vmatpush1.msra.mxu0 %v170
    %213 = vmatprep.subr.mxu0 0.0
    %214 = vmatpush1.msra.mxu0 %v169
    %215 = vmatprep.subr.mxu0 0.0
    %216 = vmatpush1.msra.mxu0 %v168
    %217 = vmatprep.subr.mxu0 0.0
    %218 = vmatpush1.msra.mxu0 %v167
    %219 = vmatprep.subr.mxu0 0.0
    %220 = vmatpush1.msra.mxu0 %v166
    %221 = vmatprep.subr.mxu0 0.0
    %222 = vmatpush2.msra.mxu0 0.0
    %223 = vmatprep.subr.mxu0 0.0
    %224 = vmatpush2.msra.mxu0 0.0
    %225 = vmatprep.subr.mxu0 0.0
    %226 = vmatpush2.msra.mxu0 0.0
    %227 = vmatprep.subr.mxu0 0.0
    %228 = vmatpush2.msra.mxu0 0.0
    %229 = vmatprep.subr.mxu0 0.0
    %230 = vmatpush2.msra.mxu0 0.0
    %231 = vmatprep.subr.mxu0 0.0
    %232 = vmatpush2.msra.mxu0 0.0
    %233 = vmatprep.subr.mxu0 0.0
    %234 = vmatpush2.msra.mxu0 0.0
    %235 = vmatprep.subr.mxu0 0.0
    %236 = vmatpush2.msra.mxu0 0.0
    %237 = vmatprep.subr.mxu0 0.0
    %238 = vmatpush2.msra.mxu0 0.0
    %239 = vmatprep.subr.mxu0 0.0
    %240 = vmatpush2.msra.mxu0 0.0
    %241 = vmatprep.subr.mxu0 0.0
    %242 = vmatpush2.msra.mxu0 0.0
    %243 = vmatprep.subr.mxu0 0.0
    %244 = vmatpush2.msra.mxu0 0.0
    %245 = vmatprep.subr.mxu0 0.0
    %246 = vmatpush2.msra.mxu0 0.0
    %247 = vmatprep.subr.mxu0 0.0
    %248 = vmatpush2.msra.mxu0 0.0
    %249 = vmatprep.subr.mxu0 0.0
    %250 = vmatpush2.msra.mxu0 0.0
    %251 = vmatprep.subr.mxu0 0.0
    %252 = vmatpush2.msra.mxu0 0.0
    %253 = vmatprep.mubr.f32.mxu0 0.0
    %254 = vmatmul.mubr.f32.gmra.mxu0 %v163
    %v255 = vpop.f32.mrf.mxu0
    %v256 = vadd.f32 %v187, %v255
    %v257 = vpop.f32.mrf.mxu0
    %258 = vdwg.mxu0
    %v259 = vld [vmem:[#allocation8] sm:$0xff]
    %v260 = vld [vmem:[#allocation8 + $0x8] sm:$0xff]
    %v261 = vld [vmem:[#allocation8 + $0x10] sm:$0xff]
    %v262 = vld [vmem:[#allocation8 + $0x18] sm:$0xff]
    %v263 = vld [vmem:[#allocation8 + $0x20] sm:$0xff]
    %v264 = vld [vmem:[#allocation8 + $0x28] sm:$0xff]
    %v265 = vld [vmem:[#allocation8 + $0x30] sm:$0xff]
    %v266 = vld [vmem:[#allocation8 + $0x38] sm:$0xff]
    %v267 = vld [vmem:[#allocation8 + $0x40] sm:$0xff]
    %v268 = vld [vmem:[#allocation8 + $0x48] sm:$0xff]
    %v269 = vld [vmem:[#allocation8 + $0x50] sm:$0xff]
    %v270 = vld [vmem:[#allocation8 + $0x58] sm:$0xff]
    %v271 = vld [vmem:[#allocation8 + $0x60] sm:$0xff]
    %v272 = vld [vmem:[#allocation8 + $0x68] sm:$0xff]
    %v273 = vld [vmem:[#allocation8 + $0x70] sm:$0xff]
    %v274 = vld [vmem:[#allocation8 + $0x78] sm:$0xff]
    %v275 = vld [vmem:[%s6] sm:$0x1]
    %v277 = vlaneseq
    %v278 = vshrl.u32 %v277, 7
    %v279 = vsub.s32 0, %v278
    %v280 = vrot.slane %v275, %v279
    %282 = vmatprep.subr.mxu0 0.0
    %283 = vmatpush1.msra.mxu0 %v274
    %284 = vmatprep.subr.mxu0 0.0
    %285 = vmatpush1.msra.mxu0 %v273
    %286 = vmatprep.subr.mxu0 0.0
    %287 = vmatpush1.msra.mxu0 %v272
    %288 = vmatprep.subr.mxu0 0.0
    %289 = vmatpush1.msra.mxu0 %v271
    %290 = vmatprep.subr.mxu0 0.0
    %291 = vmatpush1.msra.mxu0 %v270
    %292 = vmatprep.subr.mxu0 0.0
    %293 = vmatpush1.msra.mxu0 %v269
    %294 = vmatprep.subr.mxu0 0.0
    %295 = vmatpush1.msra.mxu0 %v268
    %296 = vmatprep.subr.mxu0 0.0
    %297 = vmatpush1.msra.mxu0 %v267
    %298 = vmatprep.subr.mxu0 0.0
    %299 = vmatpush1.msra.mxu0 %v266
    %300 = vmatprep.subr.mxu0 0.0
    %301 = vmatpush1.msra.mxu0 %v265
    %302 = vmatprep.subr.mxu0 0.0
    %303 = vmatpush1.msra.mxu0 %v264
    %304 = vmatprep.subr.mxu0 0.0
    %305 = vmatpush1.msra.mxu0 %v263
    %306 = vmatprep.subr.mxu0 0.0
    %307 = vmatpush1.msra.mxu0 %v262
    %308 = vmatprep.subr.mxu0 0.0
    %309 = vmatpush1.msra.mxu0 %v261
    %310 = vmatprep.subr.mxu0 0.0
    %311 = vmatpush1.msra.mxu0 %v260
    %312 = vmatprep.subr.mxu0 0.0
    %313 = vmatpush1.msra.mxu0 %v259
    %314 = vmatprep.subr.mxu0 0.0
    %315 = vmatpush2.msra.mxu0 0.0
    %316 = vmatprep.subr.mxu0 0.0
    %317 = vmatpush2.msra.mxu0 0.0
    %318 = vmatprep.subr.mxu0 0.0
    %319 = vmatpush2.msra.mxu0 0.0
    %320 = vmatprep.subr.mxu0 0.0
    %321 = vmatpush2.msra.mxu0 0.0
    %322 = vmatprep.subr.mxu0 0.0
    %323 = vmatpush2.msra.mxu0 0.0
    %324 = vmatprep.subr.mxu0 0.0
    %325 = vmatpush2.msra.mxu0 0.0
    %326 = vmatprep.subr.mxu0 0.0
    %327 = vmatpush2.msra.mxu0 0.0
    %328 = vmatprep.subr.mxu0 0.0
    %329 = vmatpush2.msra.mxu0 0.0
    %330 = vmatprep.subr.mxu0 0.0
    %331 = vmatpush2.msra.mxu0 0.0
    %332 = vmatprep.subr.mxu0 0.0
    %333 = vmatpush2.msra.mxu0 0.0
    %334 = vmatprep.subr.mxu0 0.0
    %335 = vmatpush2.msra.mxu0 0.0
    %336 = vmatprep.subr.mxu0 0.0
    %337 = vmatpush2.msra.mxu0 0.0
    %338 = vmatprep.subr.mxu0 0.0
    %339 = vmatpush2.msra.mxu0 0.0
    %340 = vmatprep.subr.mxu0 0.0
    %341 = vmatpush2.msra.mxu0 0.0
    %342 = vmatprep.subr.mxu0 0.0
    %343 = vmatpush2.msra.mxu0 0.0
    %344 = vmatprep.subr.mxu0 0.0
    %345 = vmatpush2.msra.mxu0 0.0
    %346 = vmatprep.mubr.f32.mxu0 0.0
    %347 = vmatmul.mubr.f32.gmra.mxu0 %v256
    %v348 = vpop.f32.mrf.mxu0
    %v349 = vadd.f32 %v280, %v348
    %v350 = vpop.f32.mrf.mxu0
    %351 = vdwg.mxu0
    %352 = vst [vmem:[#allocation10] sm:$0xff] %v349
    // Predicated region
    $region46: #{tpu_custom_call.1} parent=1 // pred_check
      _
    $region47: #{tpu_custom_call.1} parent=1 // pred_check_branch
      %354 = sbr.rel (0) target = $region49
    $region48: #{tpu_custom_call.1} parent=1 // pred_region
      %s356 = ssub.s32 128, 128
      %357 = vsyncadd [#allocation4], %s356
      %s359 = sshll.u32 [#allocation10], 4
      %s360 = int_to_ptr.vmem [resolvable:$true] %s359
      %362 = dma.vmem_to_hbm [thread:$0]  %s360, 128, %s7, [#allocation4]
    $region49: #{tpu_custom_call.1} parent=1 // pred_fallthru
      _
    // Predicated region
    $region50: #{tpu_custom_call.1} parent=1 // pred_check
      _
    $region51: #{tpu_custom_call.1} parent=1 // pred_check_branch
      %364 = sbr.rel (0) target = $region53
    $region52: #{tpu_custom_call.1} parent=1 // pred_region
      %365 = dma.done [#allocation4], 128
    $region53: #{tpu_custom_call.1} parent=1 // pred_fallthru
      _
    %366 = vsyncpa [#allocation3], 1
    %367 = vsyncpa [#allocation6], 1
    %368 = vsyncpa [#allocation9], 1
    %369 = vsyncpa [#allocation4], 1

</llo_original>
